<compile_context>
chip_gen: v6e
topology: v6e:2x2x1
jax: 0.10.0
libtpu: 0.0.40
codegen_flags: <defaults>
</compile_context>

<pallas_src>
import jax
import jax.numpy as jnp
from jax.experimental import pallas as pl
from jax.experimental.pallas import tpu as pltpu


def _round_up(x, m):
    return ((x + m - 1) // m) * m


def _r1_sumsq_kernel(g_ref, o_ref, acc_ref):
    """Per chunk: acc += g*g each step; reduce acc -> scalar on the last step."""
    j = pl.program_id(1)

    @pl.when(j == 0)
    def _():
        acc_ref[...] = jnp.zeros_like(acc_ref)

    g = g_ref[...].astype(jnp.float32)   # upcast on the VPU (free; required on v5e)
    acc_ref[...] += g * g

    @pl.when(j == pl.num_programs(1) - 1)
    def _():
        s = jnp.sum(acc_ref[...])        # one XLU reduction per chunk, not per step
        o_ref[...] = jnp.full(o_ref.shape, s, dtype=jnp.float32)


def r1_penalty_from_grad(grad_d_out):
    """Pallas-fused: 0.5 * mean_over_batch( sum_over_rest(grad^2) )."""
    B = grad_d_out.shape[0]
    g = grad_d_out.reshape(-1)           # native dtype; no wrapper-side f32 copy
    N = g.shape[0]

    LANES = 512                          # lane axis: multiple of 128
    TR_TARGET = 512                      # 512x512 f32 block = 1 MiB; 2 bufs + 1 MiB acc
                                         # ~= 3 MiB VMEM -> safe on v5e/v6e/v7x defaults
    N_CHUNKS = 2                         # megacore split for v7x; neutral on 1-TC chips

    rows = pl.cdiv(N, LANES)
    # Rows per block: multiple of 16 (dtype-safe sublane tiling), shrunk for small inputs.
    TR = min(TR_TARGET, _round_up(pl.cdiv(rows, N_CHUNKS), 16))
    rows_padded = _round_up(rows, N_CHUNKS * TR)
    total = rows_padded * LANES
    if total != N:
        g = jnp.pad(g, (0, total - N))   # zero pad: contributes 0 to sum of squares
    g2d = g.reshape(rows_padded, LANES)

    blocks_per_chunk = rows_padded // (N_CHUNKS * TR)

    out = pl.pallas_call(
        _r1_sumsq_kernel,
        out_shape=jax.ShapeDtypeStruct((N_CHUNKS, 8, 128), jnp.float32),
        grid_spec=pltpu.PrefetchScalarGridSpec(
            num_scalar_prefetch=0,
            grid=(N_CHUNKS, blocks_per_chunk),
            in_specs=[pl.BlockSpec(
                (TR, LANES),
                lambda c, j: (c * blocks_per_chunk + j, 0))],
            out_specs=pl.BlockSpec((1, 8, 128), lambda c, j: (c, 0, 0)),
            scratch_shapes=[pltpu.VMEM((TR, LANES), jnp.float32)],
        ),
        compiler_params=pltpu.CompilerParams(
            dimension_semantics=("parallel", "arbitrary"),
        ),
    )(g2d)

    # Each chunk's partial sum is broadcast over its (8,128) output block.
    partials = out[:, 0, 0]
    return (0.5 / B) * jnp.sum(partials)   # apply the scale once, in the wrapper


def r1_reg_loss(d_fn, x_in):
    """Full R1RegLoss.forward equivalent."""
    # TODO(synk): autograd itself (torch.autograd.grad) has no Pallas equivalent;
    # it is realized via jax.grad, only the squared-norm reduction runs in Pallas.
    grad_d_out = jax.grad(lambda x: jnp.sum(d_fn(x)))(x_in)
    assert grad_d_out.shape == x_in.shape
    return r1_penalty_from_grad(grad_d_out)


if __name__ == "__main__":
    # Small, deterministic setup consistent with the module's forward:
    # x_in: NCHW image batch; D: tiny deterministic "discriminator".
    B, C, H, W = 2, 4, 16, 16
    F = C * H * W

    key = jax.random.PRNGKey(0)
    k_x, k_w = jax.random.split(key)
    x_in = jax.random.normal(k_x, (B, C, H, W), dtype=jnp.float32)
    w_d = jax.random.normal(k_w, (F,), dtype=jnp.float32) * 0.1

    def d_fn(x):
        # Simple differentiable discriminator: per-sample scalar score.
        return jnp.tanh(x.reshape(x.shape[0], -1)) @ w_d

    reg = r1_reg_loss(d_fn, x_in)
    reg = jax.block_until_ready(reg)

    # Pure-JAX reference for a sanity check.
    grad_ref = jax.grad(lambda x: jnp.sum(d_fn(x)))(x_in)
    reg_ref = 0.5 * jnp.mean(jnp.sum((grad_ref ** 2).reshape(B, -1), axis=1))
    assert jnp.allclose(reg, reg_ref, rtol=1e-5, atol=1e-6), (reg, reg_ref)

    print("KERNEL_OK")
</pallas_src>

<mosaic_0001>
module attributes {stable_mosaic.version = 11 : i64} {
  func.func @_r1_sumsq_kernel(%arg0: i32, %arg1: i32, %arg2: memref<16x512xf32, #tpu.memory_space<vmem>>, %arg3: memref<1x8x128xf32, #tpu.memory_space<vmem>>, %arg4: memref<16x512xf32, #tpu.memory_space<vmem>>) attributes {dimension_semantics = [#tpu.dimension_semantics<parallel>, #tpu.dimension_semantics<arbitrary>], iteration_bounds = array<i64: 2, 1>, scalar_prefetch = 0 : i64, scratch_operands = 1 : i64, tpu.core_type = #tpu.core_type<tc>, window_params = [{transform_indices = @transform_0, window_bounds = array<i64: 16, 512>}, {transform_indices = @transform_1, window_bounds = array<i64: 1, 8, 128>}]} {
    %c0_i32 = arith.constant 0 : i32
    %0 = arith.cmpi eq, %arg1, %c0_i32 : i32
    %1 = arith.extui %0 : i1 to i32
    %c0_i32_0 = arith.constant 0 : i32
    %2 = arith.cmpi ne, %1, %c0_i32_0 : i32
    scf.if %2 {
      %cst = arith.constant 0.000000e+00 : f32
      %11 = vector.broadcast %cst : f32 to vector<16x512xf32>
      %c0_8 = arith.constant 0 : index
      %c0_9 = arith.constant 0 : index
      %12 = vector.load %arg4[%c0_8, %c0_9] : memref<16x512xf32, #tpu.memory_space<vmem>>, vector<16x512xf32>
      tpu.vector_store %arg4[%c0_8, %c0_9], %11 {strides = array<i32>} : memref<16x512xf32, #tpu.memory_space<vmem>>, vector<16x512xf32>,
    } else {
    }
    %c0 = arith.constant 0 : index
    %c0_1 = arith.constant 0 : index
    %3 = vector.load %arg2[%c0, %c0_1] : memref<16x512xf32, #tpu.memory_space<vmem>>, vector<16x512xf32>
    %c0_2 = arith.constant 0 : index
    %c0_3 = arith.constant 0 : index
    %4 = vector.load %arg4[%c0_2, %c0_3] : memref<16x512xf32, #tpu.memory_space<vmem>>, vector<16x512xf32>
    %5 = arith.mulf %3, %3 : vector<16x512xf32>
    %6 = arith.addf %4, %5 : vector<16x512xf32>
    %c0_4 = arith.constant 0 : index
    %c0_5 = arith.constant 0 : index
    %7 = vector.load %arg4[%c0_4, %c0_5] : memref<16x512xf32, #tpu.memory_space<vmem>>, vector<16x512xf32>
    tpu.vector_store %arg4[%c0_4, %c0_5], %6 {strides = array<i32>} : memref<16x512xf32, #tpu.memory_space<vmem>>, vector<16x512xf32>,
    %c0_i32_6 = arith.constant 0 : i32
    %8 = arith.cmpi eq, %arg1, %c0_i32_6 : i32
    %9 = arith.extui %8 : i1 to i32
    %c0_i32_7 = arith.constant 0 : i32
    %10 = arith.cmpi ne, %9, %c0_i32_7 : i32
    scf.if %10 {
      %c0_8 = arith.constant 0 : index
      %c0_9 = arith.constant 0 : index
      %11 = vector.load %arg4[%c0_8, %c0_9] : memref<16x512xf32, #tpu.memory_space<vmem>>, vector<16x512xf32>
      %12 = vector.shape_cast %11 : vector<16x512xf32> to vector<1x16x512xf32>
      %cst = arith.constant dense<0.000000e+00> : vector<1xf32>
      %13 = vector.multi_reduction <add>, %12, %cst [1, 2] : vector<1x16x512xf32> to vector<1xf32>
      %14 = vector.shape_cast %13 : vector<1xf32> to vector<1x1x1xf32>
      %15 = vector.extract %14[0, 0, 0] : f32 from vector<1x1x1xf32>
      %16 = vector.broadcast %15 : f32 to vector<1x8x128xf32>
      %c0_10 = arith.constant 0 : index
      %c0_11 = arith.constant 0 : index
      %c0_12 = arith.constant 0 : index
      %17 = vector.load %arg3[%c0_10, %c0_11, %c0_12] : memref<1x8x128xf32, #tpu.memory_space<vmem>>, vector<1x8x128xf32>
      tpu.vector_store %arg3[%c0_10, %c0_11, %c0_12], %16 {strides = array<i32>} : memref<1x8x128xf32, #tpu.memory_space<vmem>>, vector<1x8x128xf32>,
    } else {
    }
    return
  }
  func.func @transform_0(%arg0: i32, %arg1: i32) -> (i32, i32) {
    %c1_i32 = arith.constant 1 : i32
    %0 = arith.muli %arg0, %c1_i32 : i32
    %1 = arith.addi %0, %arg1 : i32
    %c0_i32 = arith.constant 0 : i32
    %c0_i32_0 = arith.constant 0 : i32
    return %1, %c0_i32 : i32, i32
  }
  func.func @transform_1(%arg0: i32, %arg1: i32) -> (i32, i32, i32) {
    %c0_i32 = arith.constant 0 : i32
    %c0_i32_0 = arith.constant 0 : i32
    %c0_i32_1 = arith.constant 0 : i32
    return %arg0, %c0_i32, %c0_i32_0 : i32, i32, i32
  }
}

</mosaic_0001>

<llo_original>
// kernel: tpu_custom_call.1
$region0: #{tpu_custom_call.1}
  #allocation0 [shape = 'u32[]', space=smem, size = 0x4, offset = 0x4, fixed_abs, tag = 'smem constant byte address 0x4 - core index']
  #allocation1 [shape = 'u32[144,128]{1,0:T(1,128)}', space=vmem, size = 0x12000, scoped, tag = 'internal scratch']
  #allocation2 [shape = 'f32[16,512]{1,0:T(8,128)}', space=vmem, size = 0x8000, scoped, tag = 'scratch operand']
  %s0 = inlined_call_operand.hbm [shape: f32[32,512], index: 0, kind: input, shape index: {}]
  %s1 = inlined_call_operand.hbm [shape: f32[2,8,128], index: 1, kind: output, shape index: {}]
  %s2 = sld [smem:[#allocation0]]
  $region49: #{tpu_custom_call.1} parent=0
    _
  %s4 = ssub.s32 1, %s2
  %s5 = scalar_select 0, %s4, %s2
  $region1: #{tpu_custom_call.1} parent=0
    #allocation3 [shape = 'u8[65536]{0}', space=vmem, size = 0x10000, scoped, tag = 'input window, operand 0']
    #allocation4 [shape = 's32[2]{0}', space=sflag, size = 0x8, scoped, tag = 'scoped memory for tpu_custom_call.1']
    #allocation5 [shape = 's32[2]{0}', space=sflag, size = 0x8, scoped, tag = 'scoped memory for tpu_custom_call.1']
    #allocation6 [shape = 'u8[8192]{0}', space=vmem, size = 0x2000, scoped, tag = 'output window, operand 0']
    %6 = vsyncpa [#allocation4], 0
    %s7 = scalar_lea.sflag [#allocation4], 1
    %8 = vsyncpa %s7, 0
    %9 = vsyncpa [#allocation5], 0
    %s10 = scalar_lea.sflag [#allocation5], 1
    %11 = vsyncpa %s10, 0
    loop: start=0, step=1, limit=4
    $region2: #{tpu_custom_call.1} parent=1 // loop_pre_header
      _
    $region3: #{tpu_custom_call.1} parent=1 // loop_header
      %s13 = sphi 0, %s17
      %p14 = scmp.ge.s32.totalorder %s13, 4
      %s20 = sphi 0, %s32
      %s21 = sphi 0, %s28
      %s22 = sphi 0, %s20
      %s23 = sphi 0, %s21
      %s24 = sphi 0, %s22
      %s25 = sphi 0, %s23
      %s37 = sphi 0, %s39
      %s40 = sphi 0, %s37
      %s41 = sphi 0, %s40
      %s57 = sphi 0, %s41
      %s63 = sphi 0, %s65
      %s66 = sphi 0, %s63
      %s67 = sphi 0, %s66
      %s83 = sphi 0, %s67
    $region4: #{tpu_custom_call.1} parent=1 // loop_header_branch
      %16 = sbr.rel (%p14) target = $region8
    $region5: #{tpu_custom_call.1} parent=1 // loop_body
      %s18 = ssub.s32 %s13, 1
      %s19 = ssub.s32 %s13, 2
      %s26 = sadd.s32 1, %s21
      %p27 = scmp.ge.s32.totalorder %s26, 1
      %s28 = scalar_select %p27, 0, %s26
      %s29 = sadd.s32 1, %s20
      %s30 = scalar_select %p27, %s29, %s20
      %p31 = scmp.ge.s32.totalorder %s30, 2
      %s32 = scalar_select %p31, 0, %s30
      %s33 = sadd.s32 %s20, %s21
      %s34 = sadd.s32 %s32, %s28
      %s35 = ssub.s32 %s33, %s34
      %p36 = scmp.eq.s32.totalorder %s35, 0
      %s38 = sadd.s32 %s37, 1
      %s39 = scalar_select %p36, %s37, %s38
      %p42 = pneg %p36
      %p43 = scmp.eq.s32.totalorder %s13, 1
      %p44 = por %p42, %p43
      %p45 = scmp.ne.s32.totalorder %s37, %s40
      %p46 = scmp.eq.s32.totalorder %s13, 0
      %p47 = por %p45, %p46
      %p48 = scmp.ne.s32.totalorder %s37, %s40
      %p49 = scmp.eq.s32.totalorder %s18, 1
      %p50 = por %p48, %p49
      %p51 = scmp.ne.s32.totalorder %s40, %s41
      %p52 = scmp.eq.s32.totalorder %s18, 0
      %p53 = por %p51, %p52
      %p54 = scmp.ne.s32.totalorder %s40, %s41
      %p55 = scmp.eq.s32.totalorder %s19, 1
      %p56 = por %p54, %p55
      %p58 = scmp.ne.s32.totalorder %s41, %s57
      %p59 = scmp.eq.s32.totalorder %s19, 0
      %p60 = por %p58, %p59
      %s61 = ssub.s32 %s20, %s32
      %p62 = scmp.eq.s32.totalorder %s61, 0
      %s64 = sadd.s32 %s63, 1
      %s65 = scalar_select %p62, %s63, %s64
      %p68 = pneg %p62
      %p69 = scmp.eq.s32.totalorder %s13, 1
      %p70 = por %p68, %p69
      %p71 = scmp.ne.s32.totalorder %s63, %s66
      %p72 = scmp.eq.s32.totalorder %s13, 0
      %p73 = por %p71, %p72
      %p74 = scmp.ne.s32.totalorder %s63, %s66
      %p75 = scmp.eq.s32.totalorder %s18, 1
      %p76 = por %p74, %p75
      %p77 = scmp.ne.s32.totalorder %s66, %s67
      %p78 = scmp.eq.s32.totalorder %s18, 0
      %p79 = por %p77, %p78
      %p80 = scmp.ne.s32.totalorder %s66, %s67
      %p81 = scmp.eq.s32.totalorder %s19, 1
      %p82 = por %p80, %p81
      %p84 = scmp.ne.s32.totalorder %s67, %s83
      %p85 = scmp.eq.s32.totalorder %s19, 0
      %p86 = por %p84, %p85
      %p87 = scmp.le.s32.totalorder 1, %s13
      %p88 = scmp.lt.s32.totalorder %s13, 3
      %p89 = pnand %p87, %p88
      %p90 = pneg %p89
      // Predicated region
      $region9: #{tpu_custom_call.1} parent=5 // pred_check
        _
      $region10: #{tpu_custom_call.1} parent=5 // pred_check_branch
        %92 = sbr.rel (%p89) target = $region12
      $region11: #{tpu_custom_call.1} parent=5 // pred_region
        %s93 = ssub.s32 %s13, 1
      $region12: #{tpu_custom_call.1} parent=5 // pred_fallthru
        _
      %p94 = scmp.lt.s32.totalorder %s13, 2
      // Predicated region
      $region13: #{tpu_custom_call.1} parent=5 // pred_check
        %p95 = pneg %p94
      $region14: #{tpu_custom_call.1} parent=5 // pred_check_branch
        %97 = sbr.rel (%p95) target = $region16
      $region15: #{tpu_custom_call.1} parent=5 // pred_region
        // Predicated region
        $region17: #{tpu_custom_call.1} parent=15 // pred_check
          %p98 = pneg %p47
        $region18: #{tpu_custom_call.1} parent=15 // pred_check_branch
          %100 = sbr.rel (%p98) target = $region20
        $region19: #{tpu_custom_call.1} parent=15 // pred_region
          %s101 = sand.u32 %s37, 1
          %s102 = scalar_lea.sflag [#allocation4], %s101
          %s103 = sand.u32 %s37, 1
          %s104 = smul.addr %s103, 64
          %s105 = scalar_lea.vmem [#allocation3], %s104
          %s106 = sadd.s32 %s20, %s21
          %s107 = smul.u32 2, %s106
          %s109 = ssub.s32 1024, 1024
          %110 = vsyncadd %s102, %s109
          %s111 = smul.addr %s107, 4
          %s112 = smul.addr %s111, 128
          %s113 = scalar_lea.hbm %s0, %s112
          %s114 = sshll.u32 %s105, 4
          %s115 = int_to_ptr.vmem [resolvable:$true] %s114
          %120 = dma.hbm_to_vmem [thread:$0]  %s113, 1024, %s115, %s102, 512, 512, 32
        $region20: #{tpu_custom_call.1} parent=15 // pred_fallthru
          _
      $region16: #{tpu_custom_call.1} parent=5 // pred_fallthru
        _
      %p121 = scmp.le.s32.totalorder 1, %s13
      %p122 = scmp.lt.s32.totalorder %s13, 3
      %p123 = pnand %p121, %p122
      %p124 = pneg %p123
      // Predicated region
      $region21: #{tpu_custom_call.1} parent=5 // pred_check
        _
      $region22: #{tpu_custom_call.1} parent=5 // pred_check_branch
        %126 = sbr.rel (%p123) target = $region24
      $region23: #{tpu_custom_call.1} parent=5 // pred_region
        %s127 = ssub.s32 %s13, 1
        %s128 = sand.u32 %s40, 1
        %s129 = scalar_lea.sflag [#allocation4], %s128
        %s130 = sand.u32 %s40, 1
        %s131 = smul.addr %s130, 64
        %s132 = scalar_lea.vmem [#allocation3], %s131
        // Predicated region
        $region25: #{tpu_custom_call.1} parent=23 // pred_check
          %p133 = pneg %p53
        $region26: #{tpu_custom_call.1} parent=23 // pred_check_branch
          %135 = sbr.rel (%p133) target = $region28
        $region27: #{tpu_custom_call.1} parent=23 // pred_region
          %136 = dma.done %s129, 1024
        $region28: #{tpu_custom_call.1} parent=23 // pred_fallthru
          _
        %s137 = sand.u32 %s40, 1
        %s138 = scalar_lea.sflag [#allocation4], %s137
        %s139 = sand.u32 %s40, 1
        %s140 = smul.addr %s139, 64
        %s141 = scalar_lea.vmem [#allocation3], %s140
        %p142 = pneg %p53
        %p143 = pneg %p50
        %p144 = pneg %p79
        %p145 = pneg %p76
        %s146 = sand.u32 %s66, 1
        %s147 = scalar_lea.sflag [#allocation5], %s146
        %s148 = sand.u32 %s66, 1
        %s149 = smul.addr %s148, 8
        %s150 = scalar_lea.vmem [#allocation6], %s149
        %s151 = sadd.s32 %s22, %s23
        %s152 = smul.u32 2, %s151
        %p153 = scmp.eq.s32.totalorder %s23, 0
        // Predicated region
        $region29: #{tpu_custom_call.1} parent=23 // pred_check
          %p154 = pneg %p153
        $region30: #{tpu_custom_call.1} parent=23 // pred_check_branch
          %156 = sbr.rel (%p154) target = $region32
        $region31: #{tpu_custom_call.1} parent=23 // pred_region
          %157 = vst [vmem:[#allocation2] sm:$0xff] 0.0
          %158 = vst [vmem:[#allocation2 + $0x8] sm:$0xff] 0.0
          %159 = vst [vmem:[#allocation2 + $0x10] sm:$0xff] 0.0
          %160 = vst [vmem:[#allocation2 + $0x18] sm:$0xff] 0.0
          %161 = vst [vmem:[#allocation2 + $0x20] sm:$0xff] 0.0
          %162 = vst [vmem:[#allocation2 + $0x28] sm:$0xff] 0.0
          %163 = vst [vmem:[#allocation2 + $0x30] sm:$0xff] 0.0
          %164 = vst [vmem:[#allocation2 + $0x38] sm:$0xff] 0.0
        $region32: #{tpu_custom_call.1} parent=23 // pred_fallthru
          _
        %v165 = vld [vmem:[%s132] sm:$0xff]
        %v166 = vld [vmem:[%s132 + $0x8] sm:$0xff]
        %v167 = vld [vmem:[%s132 + $0x10] sm:$0xff]
        %v168 = vld [vmem:[%s132 + $0x18] sm:$0xff]
        %v169 = vld [vmem:[%s132 + $0x20] sm:$0xff]
        %v170 = vld [vmem:[%s132 + $0x28] sm:$0xff]
        %v171 = vld [vmem:[%s132 + $0x30] sm:$0xff]
        %v172 = vld [vmem:[%s132 + $0x38] sm:$0xff]
        %v173 = vld [vmem:[#allocation2] sm:$0xff]
        %v174 = vld [vmem:[#allocation2 + $0x8] sm:$0xff]
        %v175 = vld [vmem:[#allocation2 + $0x10] sm:$0xff]
        %v176 = vld [vmem:[#allocation2 + $0x18] sm:$0xff]
        %v177 = vld [vmem:[#allocation2 + $0x20] sm:$0xff]
        %v178 = vld [vmem:[#allocation2 + $0x28] sm:$0xff]
        %v179 = vld [vmem:[#allocation2 + $0x30] sm:$0xff]
        %v180 = vld [vmem:[#allocation2 + $0x38] sm:$0xff]
        %v181 = vmul.f32 %v165, %v165
        %v182 = vmul.f32 %v166, %v166
        %v183 = vmul.f32 %v167, %v167
        %v184 = vmul.f32 %v168, %v168
        %v185 = vmul.f32 %v169, %v169
        %v186 = vmul.f32 %v170, %v170
        %v187 = vmul.f32 %v171, %v171
        %v188 = vmul.f32 %v172, %v172
        %v189 = vadd.f32 %v173, %v181
        %v190 = vadd.f32 %v174, %v182
        %v191 = vadd.f32 %v175, %v183
        %v192 = vadd.f32 %v176, %v184
        %v193 = vadd.f32 %v177, %v185
        %v194 = vadd.f32 %v178, %v186
        %v195 = vadd.f32 %v179, %v187
        %v196 = vadd.f32 %v180, %v188
        %197 = vst [vmem:[#allocation2] sm:$0xff] %v189
        %198 = vst [vmem:[#allocation2 + $0x8] sm:$0xff] %v190
        %199 = vst [vmem:[#allocation2 + $0x10] sm:$0xff] %v191
        %200 = vst [vmem:[#allocation2 + $0x18] sm:$0xff] %v192
        %201 = vst [vmem:[#allocation2 + $0x20] sm:$0xff] %v193
        %202 = vst [vmem:[#allocation2 + $0x28] sm:$0xff] %v194
        %203 = vst [vmem:[#allocation2 + $0x30] sm:$0xff] %v195
        %204 = vst [vmem:[#allocation2 + $0x38] sm:$0xff] %v196
        // Predicated region
        $region33: #{tpu_custom_call.1} parent=23 // pred_check
          %p205 = pneg %p153
        $region34: #{tpu_custom_call.1} parent=23 // pred_check_branch
          %207 = sbr.rel (%p205) target = $region36
        $region35: #{tpu_custom_call.1} parent=23 // pred_region
          %v208 = vld [vmem:[#allocation2] sm:$0xff]
          %v209 = vld [vmem:[#allocation2 + $0x8] sm:$0xff]
          %v210 = vld [vmem:[#allocation2 + $0x10] sm:$0xff]
          %v211 = vld [vmem:[#allocation2 + $0x18] sm:$0xff]
          %v212 = vld [vmem:[#allocation2 + $0x20] sm:$0xff]
          %v213 = vld [vmem:[#allocation2 + $0x28] sm:$0xff]
          %v214 = vld [vmem:[#allocation2 + $0x30] sm:$0xff]
          %v215 = vld [vmem:[#allocation2 + $0x38] sm:$0xff]
          %v216 = vadd.f32 %v208, %v209
          %v217 = vadd.f32 %v216, %v210
          %v218 = vadd.f32 %v217, %v211
          %v219 = vadd.f32 %v218, %v212
          %v220 = vadd.f32 %v219, %v213
          %v221 = vadd.f32 %v220, %v214
          %v222 = vadd.f32 %v221, %v215
          %223 = vadd.xlane.f32.xlu0 %v222
          %v224 = vpop.xlane.xlu0 %223
          %v225 = vrot.slane %v224, 4
          %v226 = vadd.f32 %v224, %v225
          %v227 = vrot.slane %v226, 2
          %v228 = vadd.f32 %v226, %v227
          %v229 = vrot.slane %v228, 1
          %v230 = vadd.f32 %v228, %v229
          %s231 = vtos %v230
          %v232 = vstv %s231
          %233 = vst [vmem:[%s150] sm:$0xff] %v232
        $region36: #{tpu_custom_call.1} parent=23 // pred_fallthru
          _
        %s234 = sand.u32 %s66, 1
        %s235 = scalar_lea.sflag [#allocation5], %s234
        %s236 = sand.u32 %s66, 1
        %s237 = smul.addr %s236, 8
        %s238 = scalar_lea.vmem [#allocation6], %s237
        // Predicated region
        $region37: #{tpu_custom_call.1} parent=23 // pred_check
          %p239 = pneg %p76
        $region38: #{tpu_custom_call.1} parent=23 // pred_check_branch
          %241 = sbr.rel (%p239) target = $region40
        $region39: #{tpu_custom_call.1} parent=23 // pred_region
          %s243 = ssub.s32 128, 128
          %244 = vsyncadd %s235, %s243
          %s245 = smul.addr %s22, 128
          %s246 = scalar_lea.hbm %s1, %s245
          %s248 = sshll.u32 %s238, 4
          %s249 = int_to_ptr.vmem [resolvable:$true] %s248
          %251 = dma.vmem_to_hbm [thread:$0]  %s249, 128, %s246, %s235
        $region40: #{tpu_custom_call.1} parent=23 // pred_fallthru
          _
      $region24: #{tpu_custom_call.1} parent=5 // pred_fallthru
        _
      %p252 = scmp.le.s32.totalorder 2, %s13
      // Predicated region
      $region41: #{tpu_custom_call.1} parent=5 // pred_check
        %p253 = pneg %p252
      $region42: #{tpu_custom_call.1} parent=5 // pred_check_branch
        %255 = sbr.rel (%p253) target = $region44
      $region43: #{tpu_custom_call.1} parent=5 // pred_region
        %s256 = ssub.s32 %s13, 2
        // Predicated region
        $region45: #{tpu_custom_call.1} parent=43 // pred_check
          %p257 = pneg %p82
        $region46: #{tpu_custom_call.1} parent=43 // pred_check_branch
          %259 = sbr.rel (%p257) target = $region48
        $region47: #{tpu_custom_call.1} parent=43 // pred_region
          %s260 = sand.u32 %s67, 1
          %s261 = scalar_lea.sflag [#allocation5], %s260
          %s262 = sand.u32 %s67, 1
          %s263 = smul.addr %s262, 8
          %s264 = scalar_lea.vmem [#allocation6], %s263
          %265 = dma.done %s261, 128
        $region48: #{tpu_custom_call.1} parent=43 // pred_fallthru
          _
      $region44: #{tpu_custom_call.1} parent=5 // pred_fallthru
        _
    $region6: #{tpu_custom_call.1} parent=1 // loop_footer
      %s17 = sadd.s32 1, %s13
    $region7: #{tpu_custom_call.1} parent=1 // loop_footer_branch
      %12 = sbr.rel target = $region3
    $region8: #{tpu_custom_call.1} parent=1 // loop_exit
      _
    %266 = vsyncpa [#allocation4], 1
    %s267 = scalar_lea.sflag [#allocation4], 1
    %268 = vsyncpa %s267, 1
    %269 = vsyncpa [#allocation5], 1
    %s270 = scalar_lea.sflag [#allocation5], 1
    %271 = vsyncpa %s270, 1

</llo_original>
